<compile_context>
chip_gen: v7x
topology: tpu7x:2x2x1
jax: 0.10.0
libtpu: 0.0.40
codegen_flags: <defaults>
</compile_context>

<pallas_src>
import functools

import jax
import jax.numpy as jnp
from jax.experimental import pallas as pl
from jax.experimental.pallas import tpu as pltpu

_LANE = 128
_SUBLANE = 8


def _round_up(n, m):
    return ((n + m - 1) // m) * m


def _mlp_kernel(x_ref, w1_ref, b1_ref, w2_ref, b2_ref, out_ref):
    # fc1 on the MXU (bf16 inputs, f32 accumulate); bias + ReLU in f32 on the
    # VPU (co-issues with MXU result pops -> effectively free filler).
    h = jnp.maximum(
        jnp.dot(x_ref[...], w1_ref[...], preferred_element_type=jnp.float32)
        + b1_ref[...],
        0.0,
    )
    # fc2: cast the activation back to the weight dtype only for the MXU input;
    # accumulate in f32 and do the bias-add / output store in f32.
    y = (
        jnp.dot(h.astype(w2_ref.dtype), w2_ref[...],
                preferred_element_type=jnp.float32)
        + b2_ref[...]
    )
    out_ref[...] = y.astype(out_ref.dtype)


def prepare_params(w1, b1, w2, b2, *, compute_dtype=jnp.bfloat16):
    """One-time (out of the forward path) lane-padding + cast of the parameters.

    w1: (S, H), b1: (1, H), w2: (H, A), b2: (1, A)   -- (in, out) layout.
    Returns ((w1_p, b1_p, w2_p, b2_p), action_dim) with H/A padded to multiples
    of 128, w1/w2 cast to `compute_dtype` (MXU operands), biases kept f32.
    """
    S, H = w1.shape
    H2, A = w2.shape
    assert H2 == H and b1.shape == (1, H) and b2.shape == (1, A)

    H_p = _round_up(H, _LANE)
    A_p = _round_up(A, _LANE)
    if H_p != H:
        w1 = jnp.pad(w1, ((0, 0), (0, H_p - H)))
        b1 = jnp.pad(b1, ((0, 0), (0, H_p - H)))
        w2 = jnp.pad(w2, ((0, H_p - H), (0, 0)))
    if A_p != A:
        w2 = jnp.pad(w2, ((0, 0), (0, A_p - A)))
        b2 = jnp.pad(b2, ((0, 0), (0, A_p - A)))

    w1 = w1.astype(compute_dtype)          # MXU operand
    w2 = w2.astype(compute_dtype)          # MXU operand
    b1 = b1.astype(jnp.float32)            # elementwise stays f32 (v5e VPU)
    b2 = b2.astype(jnp.float32)
    return (w1, b1, w2, b2), A


def decision_transformer_forward(x, padded_params, action_dim, *, tile_b=1024):
    """x: (B, state_dim) f32. padded_params from prepare_params().
    Returns (B, action_dim) f32 == PyTorch fc2(relu(fc1(x)))."""
    w1, b1, w2, b2 = padded_params
    B, S = x.shape
    S_w, H_p = w1.shape
    H_w, A_p = w2.shape
    assert S_w == S and H_w == H_p
    assert b1.shape == (1, H_p) and b2.shape == (1, A_p)

    # ---- batch tile selection ------------------------------------------------
    # The kernel is memory / per-step-overhead bound (fc1 K = state_dim is tiny),
    # so prefer big tiles; but keep >=4 grid steps when the batch allows it so
    # v7x's two TensorCores each get >=2 pipelined steps.  Floor of 128 rows.
    B8 = _round_up(B, _SUBLANE)
    tile_b = min(tile_b, max(_LANE, B8 // 4))
    tile_b = min(tile_b, B8)
    tile_b = _round_up(tile_b, _SUBLANE)
    B_p = _round_up(B, tile_b)
    if B_p != B:
        x = jnp.pad(x, ((0, B_p - B), (0, 0)))
    x = x.astype(w1.dtype)  # bf16 MXU input: halves the streamed-x HBM bytes
    grid = (B_p // tile_b,)

    in_itemsize = jnp.dtype(w1.dtype).itemsize
    cost = pl.CostEstimate(
        flops=2 * B_p * (S * H_p + H_p * A_p),
        transcendentals=0,
        bytes_accessed=(
            in_itemsize * (B_p * S + S * H_p + H_p * A_p)   # x stream + weights
            + 4 * (H_p + A_p + B_p * A_p)                   # biases + f32 output
        ),
    )

    # Scoped-VMEM defaults (16 MiB v5e / 32 MiB v6e,v7x) are ample at the default
    # tile size; raise the limit only if tile_b is pushed very high.
    vmem_bytes = (
        2 * tile_b * S * in_itemsize          # double-buffered x tiles
        + 2 * tile_b * A_p * 4                # double-buffered f32 out tiles
        + tile_b * H_p * 4                    # f32 h intermediate
        + (S * H_p + H_p * A_p) * in_itemsize # resident weights
        + (H_p + A_p) * 4                     # resident biases
    )
    cp_kwargs = dict(dimension_semantics=("parallel",))
    if vmem_bytes > 12 * 1024 * 1024:
        cp_kwargs["vmem_limit_bytes"] = min(2 * vmem_bytes, 64 * 1024 * 1024)

    out = pl.pallas_call(
        _mlp_kernel,
        out_shape=jax.ShapeDtypeStruct((B_p, A_p), jnp.float32),
        grid=grid,
        in_specs=[
            pl.BlockSpec((tile_b, S), lambda i: (i, 0)),   # x: streamed per batch tile
            pl.BlockSpec((S, H_p), lambda i: (0, 0)),      # w1: VMEM-resident
            pl.BlockSpec((1, H_p), lambda i: (0, 0)),      # b1: VMEM-resident
            pl.BlockSpec((H_p, A_p), lambda i: (0, 0)),    # w2: VMEM-resident
            pl.BlockSpec((1, A_p), lambda i: (0, 0)),      # b2: VMEM-resident
        ],
        out_specs=pl.BlockSpec((tile_b, A_p), lambda i: (i, 0)),
        compiler_params=pltpu.CompilerParams(**cp_kwargs),
        cost_estimate=cost,
    )(x, w1, b1, w2, b2)

    # TODO(synk): at large deployment batches on v6e/v7x, benchmark a compact
    # (tile_b, A) output block (legal: last dim == full array dim) against this
    # lane-dense padded output + slice; the padded write is (128/A)x the bytes.
    return out[:B, :action_dim]


def init_params(key, state_dim, action_dim, hidden_dim):
    """Deterministic synthetic params (PyTorch nn.Linear-like uniform init)."""
    k1, k2, k3, k4 = jax.random.split(key, 4)
    bound1 = 1.0 / jnp.sqrt(state_dim)
    bound2 = 1.0 / jnp.sqrt(hidden_dim)
    # Stored as (in, out) so the kernel computes x @ W + b.
    w1 = jax.random.uniform(k1, (state_dim, hidden_dim), jnp.float32, -bound1, bound1)
    b1 = jax.random.uniform(k2, (1, hidden_dim), jnp.float32, -bound1, bound1)
    w2 = jax.random.uniform(k3, (hidden_dim, action_dim), jnp.float32, -bound2, bound2)
    b2 = jax.random.uniform(k4, (1, action_dim), jnp.float32, -bound2, bound2)
    return w1, b1, w2, b2


if __name__ == "__main__":
    # hidden_dim=128 is the module's default; batch = 2 tiles so the grid,
    # pipelining and the "parallel" axis are actually exercised.
    batch, state_dim, action_dim, hidden_dim = 256, 16, 8, 128

    key = jax.random.PRNGKey(0)
    kx, kp = jax.random.split(key)
    x = jax.random.normal(kx, (batch, state_dim), jnp.float32)
    w1, b1, w2, b2 = init_params(kp, state_dim, action_dim, hidden_dim)

    # Padding / casting of parameters happens ONCE, outside the forward path.
    padded_params, a_dim = prepare_params(w1, b1, w2, b2)

    fwd = jax.jit(functools.partial(decision_transformer_forward, action_dim=a_dim))
    out = fwd(x, padded_params)
    out = jax.block_until_ready(out)

    # Pure-JAX f32 reference (== PyTorch fc2(relu(fc1(x)))).  bf16 MXU inputs
    # deviate from the f32 reference by a few bf16 ULPs -> looser tolerance.
    ref = jnp.maximum(x @ w1 + b1, 0.0) @ w2 + b2
    assert out.shape == (batch, action_dim)
    assert jnp.allclose(out, ref, atol=3e-2, rtol=3e-2)

    print("KERNEL_OK")
</pallas_src>

<mosaic_0001>
module attributes {stable_mosaic.version = 11 : i64} {
  func.func @_mlp_kernel(%arg0: i32, %arg1: memref<128x16xbf16, #tpu.memory_space<vmem>>, %arg2: memref<16x128xbf16, #tpu.memory_space<vmem>>, %arg3: memref<1x128xf32, #tpu.memory_space<vmem>>, %arg4: memref<128x128xbf16, #tpu.memory_space<vmem>>, %arg5: memref<1x128xf32, #tpu.memory_space<vmem>>, %arg6: memref<128x128xf32, #tpu.memory_space<vmem>>) attributes {dimension_semantics = [#tpu.dimension_semantics<parallel>], iteration_bounds = array<i64: 2>, scalar_prefetch = 0 : i64, scratch_operands = 0 : i64, tpu.core_type = #tpu.core_type<tc>, window_params = [{transform_indices = @transform_0, window_bounds = array<i64: 128, 16>}, {pipeline_mode = #tpu.pipeline_mode<synchronous>, transform_indices = @transform_1, window_bounds = array<i64: 16, 128>}, {pipeline_mode = #tpu.pipeline_mode<synchronous>, transform_indices = @transform_2, window_bounds = array<i64: 1, 128>}, {pipeline_mode = #tpu.pipeline_mode<synchronous>, transform_indices = @transform_3, window_bounds = array<i64: 128, 128>}, {pipeline_mode = #tpu.pipeline_mode<synchronous>, transform_indices = @transform_4, window_bounds = array<i64: 1, 128>}, {transform_indices = @transform_5, window_bounds = array<i64: 128, 128>}]} {
    %c0 = arith.constant 0 : index
    %c0_0 = arith.constant 0 : index
    %0 = vector.load %arg1[%c0, %c0_0] : memref<128x16xbf16, #tpu.memory_space<vmem>>, vector<128x16xbf16>
    %c0_1 = arith.constant 0 : index
    %c0_2 = arith.constant 0 : index
    %1 = vector.load %arg2[%c0_1, %c0_2] : memref<16x128xbf16, #tpu.memory_space<vmem>>, vector<16x128xbf16>
    %cst = arith.constant dense<0.000000e+00> : vector<128x128xf32>
    %2 = tpu.matmul %0, %1, %cst {dimension_numbers = #tpu.dot_dimension_numbers<[1], [0], [0], [1], [0, 0, 1, 1], [], []>} : vector<128x16xbf16>, vector<16x128xbf16>, vector<128x128xf32> -> vector<128x128xf32>
    %c0_3 = arith.constant 0 : index
    %c0_4 = arith.constant 0 : index
    %3 = vector.load %arg3[%c0_3, %c0_4] : memref<1x128xf32, #tpu.memory_space<vmem>>, vector<1x128xf32>
    %4 = vector.broadcast %3 : vector<1x128xf32> to vector<128x128xf32>
    %5 = arith.addf %2, %4 : vector<128x128xf32>
    %cst_5 = arith.constant 0.000000e+00 : f32
    %6 = vector.broadcast %cst_5 : f32 to vector<128x128xf32>
    %7 = arith.maximumf %5, %6 : vector<128x128xf32>
    %8 = arith.truncf %7 : vector<128x128xf32> to vector<128x128xbf16>
    %c0_6 = arith.constant 0 : index
    %c0_7 = arith.constant 0 : index
    %9 = vector.load %arg4[%c0_6, %c0_7] : memref<128x128xbf16, #tpu.memory_space<vmem>>, vector<128x128xbf16>
    %cst_8 = arith.constant dense<0.000000e+00> : vector<128x128xf32>
    %10 = tpu.matmul %8, %9, %cst_8 {dimension_numbers = #tpu.dot_dimension_numbers<[1], [0], [0], [1], [0, 0, 1, 1], [], []>} : vector<128x128xbf16>, vector<128x128xbf16>, vector<128x128xf32> -> vector<128x128xf32>
    %c0_9 = arith.constant 0 : index
    %c0_10 = arith.constant 0 : index
    %11 = vector.load %arg5[%c0_9, %c0_10] : memref<1x128xf32, #tpu.memory_space<vmem>>, vector<1x128xf32>
    %12 = vector.broadcast %11 : vector<1x128xf32> to vector<128x128xf32>
    %13 = arith.addf %10, %12 : vector<128x128xf32>
    %c0_11 = arith.constant 0 : index
    %c0_12 = arith.constant 0 : index
    %14 = vector.load %arg6[%c0_11, %c0_12] : memref<128x128xf32, #tpu.memory_space<vmem>>, vector<128x128xf32>
    tpu.vector_store %arg6[%c0_11, %c0_12], %13 {strides = array<i32>} : memref<128x128xf32, #tpu.memory_space<vmem>>, vector<128x128xf32>,
    return
  }
  func.func @transform_0(%arg0: i32) -> (i32, i32) {
    %c0_i32 = arith.constant 0 : i32
    %c0_i32_0 = arith.constant 0 : i32
    return %arg0, %c0_i32 : i32, i32
  }
  func.func @transform_1(%arg0: i32) -> (i32, i32) {
    %c0_i32 = arith.constant 0 : i32
    %c0_i32_0 = arith.constant 0 : i32
    %c0_i32_1 = arith.constant 0 : i32
    return %c0_i32, %c0_i32_0 : i32, i32
  }
  func.func @transform_2(%arg0: i32) -> (i32, i32) {
    %c0_i32 = arith.constant 0 : i32
    %c0_i32_0 = arith.constant 0 : i32
    %c0_i32_1 = arith.constant 0 : i32
    return %c0_i32, %c0_i32_0 : i32, i32
  }
  func.func @transform_3(%arg0: i32) -> (i32, i32) {
    %c0_i32 = arith.constant 0 : i32
    %c0_i32_0 = arith.constant 0 : i32
    %c0_i32_1 = arith.constant 0 : i32
    return %c0_i32, %c0_i32_0 : i32, i32
  }
  func.func @transform_4(%arg0: i32) -> (i32, i32) {
    %c0_i32 = arith.constant 0 : i32
    %c0_i32_0 = arith.constant 0 : i32
    %c0_i32_1 = arith.constant 0 : i32
    return %c0_i32, %c0_i32_0 : i32, i32
  }
  func.func @transform_5(%arg0: i32) -> (i32, i32) {
    %c0_i32 = arith.constant 0 : i32
    %c0_i32_0 = arith.constant 0 : i32
    return %arg0, %c0_i32 : i32, i32
  }
}

</mosaic_0001>

<llo_original>
// kernel: decision_transformer_forward.1
$region0: #{decision_transformer_forward.1}
  #allocation0 [shape = 'u32[]', space=smem, size = 0x4, offset = 0x4, fixed_abs, tag = 'smem constant byte address 0x4 - core index']
  #allocation1 [shape = 'u32[144,128]{1,0:T(1,128)}', space=vmem, size = 0x12000, scoped, tag = 'internal scratch']
  %s0 = inlined_call_operand.vmem [shape: bf16[256,16], index: 0, kind: input, shape index: {}]
  %s1 = inlined_call_operand.vmem [shape: bf16[16,128], index: 1, kind: input, shape index: {}]
  %s2 = inlined_call_operand.vmem [shape: f32[1,128], index: 2, kind: input, shape index: {}]
  %s3 = inlined_call_operand.vmem [shape: bf16[128,128], index: 3, kind: input, shape index: {}]
  %s4 = inlined_call_operand.vmem [shape: f32[1,128], index: 4, kind: input, shape index: {}]
  %s5 = inlined_call_operand.vmem [shape: f32[256,128], index: 5, kind: output, shape index: {}]
  %s6 = sld [smem:[#allocation0]]
  $region53: #{decision_transformer_forward.1} parent=0
    _
  %s8 = ssub.s32 1, %s6
  %s9 = scalar_select 0, %s8, %s6
  loop: start=0, step=1, limit=4
  $region2: #{decision_transformer_forward.1} parent=0 // loop_pre_header
    _
  $region3: #{decision_transformer_forward.1} parent=0 // loop_header
    %s11 = sphi 0, %s15
    %p12 = scmp.ge.s32.totalorder %s11, 4
    %s21 = sphi 0, %s23
    %s24 = sphi 0, %s21
    %s25 = sphi 0, %s24
    %s41 = sphi 0, %s25
    %s45 = sphi 0, %s45
    %s47 = sphi 0, %s45
    %s48 = sphi 0, %s47
    %s62 = sphi 0, %s48
    %s66 = sphi 0, %s66
    %s68 = sphi 0, %s66
    %s69 = sphi 0, %s68
    %s83 = sphi 0, %s69
    %s87 = sphi 0, %s87
    %s89 = sphi 0, %s87
    %s90 = sphi 0, %s89
    %s104 = sphi 0, %s90
    %s108 = sphi 0, %s108
    %s110 = sphi 0, %s108
    %s111 = sphi 0, %s110
    %s125 = sphi 0, %s111
    %s131 = sphi 0, %s133
    %s134 = sphi 0, %s131
    %s135 = sphi 0, %s134
    %s151 = sphi 0, %s135
  $region4: #{decision_transformer_forward.1} parent=0 // loop_header_branch
    %14 = sbr.rel (%p12) target = $region8
  $region5: #{decision_transformer_forward.1} parent=0 // loop_body
    %s16 = ssub.s32 %s11, 1
    %s17 = ssub.s32 %s11, 2
    %s18 = sadd.s32 %s11, 1
    %s19 = ssub.s32 %s11, %s18
    %p20 = scmp.eq.s32.totalorder %s19, 0
    %s22 = sadd.s32 %s21, 1
    %s23 = scalar_select %p20, %s21, %s22
    %p26 = pneg %p20
    %p27 = scmp.eq.s32.totalorder %s11, 1
    %p28 = por %p26, %p27
    %p29 = scmp.ne.s32.totalorder %s21, %s24
    %p30 = scmp.eq.s32.totalorder %s11, 0
    %p31 = por %p29, %p30
    %p32 = scmp.ne.s32.totalorder %s21, %s24
    %p33 = scmp.eq.s32.totalorder %s16, 1
    %p34 = por %p32, %p33
    %p35 = scmp.ne.s32.totalorder %s24, %s25
    %p36 = scmp.eq.s32.totalorder %s16, 0
    %p37 = por %p35, %p36
    %p38 = scmp.ne.s32.totalorder %s24, %s25
    %p39 = scmp.eq.s32.totalorder %s17, 1
    %p40 = por %p38, %p39
    %p42 = scmp.ne.s32.totalorder %s25, %s41
    %p43 = scmp.eq.s32.totalorder %s17, 0
    %p44 = por %p42, %p43
    %s46 = sadd.s32 %s45, 1
    %p49 = scmp.eq.s32.totalorder %s11, 1
    %p50 = scmp.ne.s32.totalorder %s45, %s47
    %p51 = scmp.eq.s32.totalorder %s11, 0
    %p52 = por %p50, %p51
    %p53 = scmp.ne.s32.totalorder %s45, %s47
    %p54 = scmp.eq.s32.totalorder %s16, 1
    %p55 = por %p53, %p54
    %p56 = scmp.ne.s32.totalorder %s47, %s48
    %p57 = scmp.eq.s32.totalorder %s16, 0
    %p58 = por %p56, %p57
    %p59 = scmp.ne.s32.totalorder %s47, %s48
    %p60 = scmp.eq.s32.totalorder %s17, 1
    %p61 = por %p59, %p60
    %p63 = scmp.ne.s32.totalorder %s48, %s62
    %p64 = scmp.eq.s32.totalorder %s17, 0
    %p65 = por %p63, %p64
    %s67 = sadd.s32 %s66, 1
    %p70 = scmp.eq.s32.totalorder %s11, 1
    %p71 = scmp.ne.s32.totalorder %s66, %s68
    %p72 = scmp.eq.s32.totalorder %s11, 0
    %p73 = por %p71, %p72
    %p74 = scmp.ne.s32.totalorder %s66, %s68
    %p75 = scmp.eq.s32.totalorder %s16, 1
    %p76 = por %p74, %p75
    %p77 = scmp.ne.s32.totalorder %s68, %s69
    %p78 = scmp.eq.s32.totalorder %s16, 0
    %p79 = por %p77, %p78
    %p80 = scmp.ne.s32.totalorder %s68, %s69
    %p81 = scmp.eq.s32.totalorder %s17, 1
    %p82 = por %p80, %p81
    %p84 = scmp.ne.s32.totalorder %s69, %s83
    %p85 = scmp.eq.s32.totalorder %s17, 0
    %p86 = por %p84, %p85
    %s88 = sadd.s32 %s87, 1
    %p91 = scmp.eq.s32.totalorder %s11, 1
    %p92 = scmp.ne.s32.totalorder %s87, %s89
    %p93 = scmp.eq.s32.totalorder %s11, 0
    %p94 = por %p92, %p93
    %p95 = scmp.ne.s32.totalorder %s87, %s89
    %p96 = scmp.eq.s32.totalorder %s16, 1
    %p97 = por %p95, %p96
    %p98 = scmp.ne.s32.totalorder %s89, %s90
    %p99 = scmp.eq.s32.totalorder %s16, 0
    %p100 = por %p98, %p99
    %p101 = scmp.ne.s32.totalorder %s89, %s90
    %p102 = scmp.eq.s32.totalorder %s17, 1
    %p103 = por %p101, %p102
    %p105 = scmp.ne.s32.totalorder %s90, %s104
    %p106 = scmp.eq.s32.totalorder %s17, 0
    %p107 = por %p105, %p106
    %s109 = sadd.s32 %s108, 1
    %p112 = scmp.eq.s32.totalorder %s11, 1
    %p113 = scmp.ne.s32.totalorder %s108, %s110
    %p114 = scmp.eq.s32.totalorder %s11, 0
    %p115 = por %p113, %p114
    %p116 = scmp.ne.s32.totalorder %s108, %s110
    %p117 = scmp.eq.s32.totalorder %s16, 1
    %p118 = por %p116, %p117
    %p119 = scmp.ne.s32.totalorder %s110, %s111
    %p120 = scmp.eq.s32.totalorder %s16, 0
    %p121 = por %p119, %p120
    %p122 = scmp.ne.s32.totalorder %s110, %s111
    %p123 = scmp.eq.s32.totalorder %s17, 1
    %p124 = por %p122, %p123
    %p126 = scmp.ne.s32.totalorder %s111, %s125
    %p127 = scmp.eq.s32.totalorder %s17, 0
    %p128 = por %p126, %p127
    %s129 = ssub.s32 %s11, %s18
    %p130 = scmp.eq.s32.totalorder %s129, 0
    %s132 = sadd.s32 %s131, 1
    %s133 = scalar_select %p130, %s131, %s132
    %p136 = pneg %p130
    %p137 = scmp.eq.s32.totalorder %s11, 1
    %p138 = por %p136, %p137
    %p139 = scmp.ne.s32.totalorder %s131, %s134
    %p140 = scmp.eq.s32.totalorder %s11, 0
    %p141 = por %p139, %p140
    %p142 = scmp.ne.s32.totalorder %s131, %s134
    %p143 = scmp.eq.s32.totalorder %s16, 1
    %p144 = por %p142, %p143
    %p145 = scmp.ne.s32.totalorder %s134, %s135
    %p146 = scmp.eq.s32.totalorder %s16, 0
    %p147 = por %p145, %p146
    %p148 = scmp.ne.s32.totalorder %s134, %s135
    %p149 = scmp.eq.s32.totalorder %s17, 1
    %p150 = por %p148, %p149
    %p152 = scmp.ne.s32.totalorder %s135, %s151
    %p153 = scmp.eq.s32.totalorder %s17, 0
    %p154 = por %p152, %p153
    %p155 = scmp.le.s32.totalorder 1, %s11
    %p156 = scmp.lt.s32.totalorder %s11, 3
    %p157 = pnand %p155, %p156
    %p158 = pneg %p157
    // Predicated region
    $region9: #{decision_transformer_forward.1} parent=5 // pred_check
      _
    $region10: #{decision_transformer_forward.1} parent=5 // pred_check_branch
      %160 = sbr.rel (%p157) target = $region12
    $region11: #{decision_transformer_forward.1} parent=5 // pred_region
      %s161 = ssub.s32 %s11, 1
      // Predicated region
      $region13: #{decision_transformer_forward.1} parent=11 // pred_check
        %p162 = pneg %p58
      $region14: #{decision_transformer_forward.1} parent=11 // pred_check_branch
        %164 = sbr.rel (%p162) target = $region16
      $region15: #{decision_transformer_forward.1} parent=11 // pred_region
        _
      $region16: #{decision_transformer_forward.1} parent=11 // pred_fallthru
        _
      // Predicated region
      $region17: #{decision_transformer_forward.1} parent=11 // pred_check
        %p165 = pneg %p79
      $region18: #{decision_transformer_forward.1} parent=11 // pred_check_branch
        %167 = sbr.rel (%p165) target = $region20
      $region19: #{decision_transformer_forward.1} parent=11 // pred_region
        _
      $region20: #{decision_transformer_forward.1} parent=11 // pred_fallthru
        _
      // Predicated region
      $region21: #{decision_transformer_forward.1} parent=11 // pred_check
        %p168 = pneg %p100
      $region22: #{decision_transformer_forward.1} parent=11 // pred_check_branch
        %170 = sbr.rel (%p168) target = $region24
      $region23: #{decision_transformer_forward.1} parent=11 // pred_region
        _
      $region24: #{decision_transformer_forward.1} parent=11 // pred_fallthru
        _
      // Predicated region
      $region25: #{decision_transformer_forward.1} parent=11 // pred_check
        %p171 = pneg %p121
      $region26: #{decision_transformer_forward.1} parent=11 // pred_check_branch
        %173 = sbr.rel (%p171) target = $region28
      $region27: #{decision_transformer_forward.1} parent=11 // pred_region
        _
      $region28: #{decision_transformer_forward.1} parent=11 // pred_fallthru
        _
    $region12: #{decision_transformer_forward.1} parent=5 // pred_fallthru
      _
    %p174 = scmp.lt.s32.totalorder %s11, 2
    // Predicated region
    $region29: #{decision_transformer_forward.1} parent=5 // pred_check
      %p175 = pneg %p174
    $region30: #{decision_transformer_forward.1} parent=5 // pred_check_branch
      %177 = sbr.rel (%p175) target = $region32
    $region31: #{decision_transformer_forward.1} parent=5 // pred_region
      // Predicated region
      $region33: #{decision_transformer_forward.1} parent=31 // pred_check
        %p178 = pneg %p31
      $region34: #{decision_transformer_forward.1} parent=31 // pred_check_branch
        %180 = sbr.rel (%p178) target = $region36
      $region35: #{decision_transformer_forward.1} parent=31 // pred_region
        %s181 = smul.u32 16, %s11
        %p182 = scmp.lt.s32.totalorder %s181, 31
        %s183 = scalar_select %p182, %s181, 31
        %s184 = smul.addr %s183, 4
        %s185 = scalar_lea.vmem %s0, %s184
        %s186 = smul.u32 16, %s11
      $region36: #{decision_transformer_forward.1} parent=31 // pred_fallthru
        _
    $region32: #{decision_transformer_forward.1} parent=5 // pred_fallthru
      _
    %p187 = scmp.le.s32.totalorder 1, %s11
    %p188 = scmp.lt.s32.totalorder %s11, 3
    %p189 = pnand %p187, %p188
    %p190 = pneg %p189
    // Predicated region
    $region37: #{decision_transformer_forward.1} parent=5 // pred_check
      _
    $region38: #{decision_transformer_forward.1} parent=5 // pred_check_branch
      %192 = sbr.rel (%p189) target = $region40
    $region39: #{decision_transformer_forward.1} parent=5 // pred_region
      %s193 = ssub.s32 %s11, 1
      %s194 = smul.u32 16, %s16
      %p195 = scmp.lt.s32.totalorder %s194, 31
      %s196 = scalar_select %p195, %s194, 31
      %s197 = smul.addr %s196, 4
      %s198 = scalar_lea.vmem %s0, %s197
      %p199 = pneg %p37
      %p200 = pneg %p34
      %p201 = pneg %p58
      %p202 = pneg %p55
      %p203 = pneg %p79
      %p204 = pneg %p76
      %p205 = pneg %p100
      %p206 = pneg %p97
      %p207 = pneg %p121
      %p208 = pneg %p118
      %p209 = pneg %p147
      %p210 = pneg %p144
      %s211 = smul.u32 16, %s16
      %p212 = scmp.lt.s32.totalorder %s211, 31
      %s213 = scalar_select %p212, %s211, 31
      %s214 = smul.addr %s213, 8
      %s215 = scalar_lea.vmem %s5, %s214
      %s216 = smul.u32 16, %s16
      %p217 = scmp.lt.s32.totalorder %s216, 31
      %s218 = scalar_select %p217, %s216, 31
      %s219 = smul.addr %s218, 4
      %s220 = scalar_lea.vmem %s0, %s219
      %s221 = smul.u32 16, %s16
      %s222 = smul.u32 16, %s16
      %p223 = scmp.lt.s32.totalorder %s222, 31
      %s224 = scalar_select %p223, %s222, 31
      %s225 = smul.addr %s224, 8
      %s226 = scalar_lea.vmem %s5, %s225
      %s227 = smul.u32 16, %s16
      %v229 = vld [vmem:[%s220] sm:$0xf]
      %v230 = vld [vmem:[%s220 + $0x4] sm:$0xf]
      %v231 = vld [vmem:[%s220 + $0x8] sm:$0xf]
      %v232 = vld [vmem:[%s220 + $0xc] sm:$0xf]
      %v233 = vld [vmem:[%s220 + $0x10] sm:$0xf]
      %v234 = vld [vmem:[%s220 + $0x14] sm:$0xf]
      %v235 = vld [vmem:[%s220 + $0x18] sm:$0xf]
      %v236 = vld [vmem:[%s220 + $0x1c] sm:$0xf]
      %v237 = vld [vmem:[%s220 + $0x20] sm:$0xf]
      %v238 = vld [vmem:[%s220 + $0x24] sm:$0xf]
      %v239 = vld [vmem:[%s220 + $0x28] sm:$0xf]
      %v240 = vld [vmem:[%s220 + $0x2c] sm:$0xf]
      %v241 = vld [vmem:[%s220 + $0x30] sm:$0xf]
      %v242 = vld [vmem:[%s220 + $0x34] sm:$0xf]
      %v243 = vld [vmem:[%s220 + $0x38] sm:$0xf]
      %v244 = vld [vmem:[%s220 + $0x3c] sm:$0xf]
      %v245 = vld [vmem:[%s1] sm:$0xf]
      %v246 = vld [vmem:[%s1 + $0x4] sm:$0xf]
      %v247 = vld [vmem:[%s2] sm:$0x1]
      %v249 = vlaneseq
      %v250 = vshrl.u32 %v249, 7
      %v251 = vsub.s32 0, %v250
      %v252 = vrot.slane %v247, %v251
      %v270 = vunpack.c.l.b16 %v229
      %v271 = vunpack.c.l.b16 %v230
      %v272 = vunpack.c.l.b16 %v231
      %v273 = vunpack.c.l.b16 %v232
      %v274 = vunpack.c.l.b16 %v233
      %v275 = vunpack.c.l.b16 %v234
      %v276 = vunpack.c.l.b16 %v235
      %v277 = vunpack.c.l.b16 %v236
      %v278 = vunpack.c.l.b16 %v237
      %v279 = vunpack.c.l.b16 %v238
      %v280 = vunpack.c.l.b16 %v239
      %v281 = vunpack.c.l.b16 %v240
      %v282 = vunpack.c.l.b16 %v241
      %v283 = vunpack.c.l.b16 %v242
      %v284 = vunpack.c.l.b16 %v243
      %v285 = vunpack.c.l.b16 %v244
      %v286 = vpack.c.b16 %v271, %v270
      %v287 = vpack.c.b16 %v273, %v272
      %v288 = vpack.c.b16 %v275, %v274
      %v289 = vpack.c.b16 %v277, %v276
      %v290 = vpack.c.b16 %v279, %v278
      %v291 = vpack.c.b16 %v281, %v280
      %v292 = vpack.c.b16 %v283, %v282
      %v293 = vpack.c.b16 %v285, %v284
      %v296 = vunpack.c.l.b16 %v245
      %v297 = vunpack.c.l.b16 %v246
      %v298 = vpack.c.b16 %v297, %v296
      %vm300 = vcmask 130048
      %v302 = vsel %vm300, %v286, 0
      %v305 = vsel %vm300, %v287, 0
      %v308 = vsel %vm300, %v288, 0
      %v311 = vsel %vm300, %v289, 0
      %v314 = vsel %vm300, %v290, 0
      %v317 = vsel %vm300, %v291, 0
      %v320 = vsel %vm300, %v292, 0
      %v323 = vsel %vm300, %v293, 0
      %325 = vmatprep.subr.bf16.mxu0 0
      %326 = vmatpush1.bf16.msra.mxu0 %v298
      %327 = vmatprep.subr.bf16.mxu0 0
      %328 = vmatpush1.bf16.msra.mxu0 0
      %329 = vmatprep.subr.bf16.mxu0 0
      %330 = vmatpush1.bf16.msra.mxu0 0
      %331 = vmatprep.subr.bf16.mxu0 0
      %332 = vmatpush1.bf16.msra.mxu0 0
      %333 = vmatprep.subr.bf16.mxu0 0
      %334 = vmatpush1.bf16.msra.mxu0 0
      %335 = vmatprep.subr.bf16.mxu0 0
      %336 = vmatpush1.bf16.msra.mxu0 0
      %337 = vmatprep.subr.bf16.mxu0 0
      %338 = vmatpush1.bf16.msra.mxu0 0
      %339 = vmatprep.subr.bf16.mxu0 0
      %340 = vmatpush1.bf16.msra.mxu0 0
      %341 = vmatprep.subr.bf16.mxu0 0
      %342 = vmatpush1.bf16.msra.mxu0 0
      %343 = vmatprep.subr.bf16.mxu0 0
      %344 = vmatpush1.bf16.msra.mxu0 0
      %345 = vmatprep.subr.bf16.mxu0 0
      %346 = vmatpush1.bf16.msra.mxu0 0
      %347 = vmatprep.subr.bf16.mxu0 0
      %348 = vmatpush1.bf16.msra.mxu0 0
      %349 = vmatprep.subr.bf16.mxu0 0
      %350 = vmatpush1.bf16.msra.mxu0 0
      %351 = vmatprep.subr.bf16.mxu0 0
      %352 = vmatpush1.bf16.msra.mxu0 0
      %353 = vmatprep.subr.bf16.mxu0 0
      %354 = vmatpush1.bf16.msra.mxu0 0
      %355 = vmatprep.subr.bf16.mxu0 0
      %356 = vmatpush1.bf16.msra.mxu0 0
      %357 = vmatprep.mubr.bf16.mxu0 0
      %358 = vmatmul.mubr.bf16.gmra.mrb[0].mxu0 %v302
      %v359 = vpop.f32.mrb[0].mxu0
      %v360 = vadd.f32 %v252, %v359
      %v361 = vpop.f32.mrb[0].mxu0
      %v362 = vpop.f32.mrb[0].mxu0
      %v363 = vadd.f32 %v252, %v362
      %v364 = vpop.f32.mrb[0].mxu0
      %365 = vmatprep.mubr.bf16.mxu0 0
      %366 = vmatmul.mubr.bf16.gmra.mrb[0].mxu0 %v305
      %v367 = vpop.f32.mrb[0].mxu0
      %v368 = vadd.f32 %v252, %v367
      %v369 = vpop.f32.mrb[0].mxu0
      %v370 = vpop.f32.mrb[0].mxu0
      %v371 = vadd.f32 %v252, %v370
      %v372 = vpop.f32.mrb[0].mxu0
      %373 = vmatprep.mubr.bf16.mxu0 0
      %374 = vmatmul.mubr.bf16.gmra.mrb[0].mxu0 %v308
      %v375 = vpop.f32.mrb[0].mxu0
      %v376 = vadd.f32 %v252, %v375
      %v377 = vpop.f32.mrb[0].mxu0
      %v378 = vpop.f32.mrb[0].mxu0
      %v379 = vadd.f32 %v252, %v378
      %v380 = vpop.f32.mrb[0].mxu0
      %381 = vmatprep.mubr.bf16.mxu0 0
      %382 = vmatmul.mubr.bf16.gmra.mrb[0].mxu0 %v311
      %v383 = vpop.f32.mrb[0].mxu0
      %v384 = vadd.f32 %v252, %v383
      %v385 = vpop.f32.mrb[0].mxu0
      %v386 = vpop.f32.mrb[0].mxu0
      %v387 = vadd.f32 %v252, %v386
      %v388 = vpop.f32.mrb[0].mxu0
      %389 = vmatprep.mubr.bf16.mxu0 0
      %390 = vmatmul.mubr.bf16.gmra.mrb[0].mxu0 %v314
      %v391 = vpop.f32.mrb[0].mxu0
      %v392 = vadd.f32 %v252, %v391
      %v393 = vpop.f32.mrb[0].mxu0
      %v394 = vpop.f32.mrb[0].mxu0
      %v395 = vadd.f32 %v252, %v394
      %v396 = vpop.f32.mrb[0].mxu0
      %397 = vmatprep.mubr.bf16.mxu0 0
      %398 = vmatmul.mubr.bf16.gmra.mrb[0].mxu0 %v317
      %v399 = vpop.f32.mrb[0].mxu0
      %v400 = vadd.f32 %v252, %v399
      %v401 = vpop.f32.mrb[0].mxu0
      %v402 = vpop.f32.mrb[0].mxu0
      %v403 = vadd.f32 %v252, %v402
      %v404 = vpop.f32.mrb[0].mxu0
      %405 = vmatprep.mubr.bf16.mxu0 0
      %406 = vmatmul.mubr.bf16.gmra.mrb[0].mxu0 %v320
      %v407 = vpop.f32.mrb[0].mxu0
      %v408 = vadd.f32 %v252, %v407
      %v409 = vpop.f32.mrb[0].mxu0
      %v410 = vpop.f32.mrb[0].mxu0
      %v411 = vadd.f32 %v252, %v410
      %v412 = vpop.f32.mrb[0].mxu0
      %413 = vmatprep.mubr.bf16.mxu0 0
      %414 = vmatmul.mubr.bf16.gmra.mrb[0].mxu0 %v323
      %v415 = vpop.f32.mrb[0].mxu0
      %v416 = vadd.f32 %v252, %v415
      %v417 = vpop.f32.mrb[0].mxu0
      %v418 = vpop.f32.mrb[0].mxu0
      %v419 = vadd.f32 %v252, %v418
      %v420 = vpop.f32.mrb[0].mxu0
      %421 = vdwg.mxu0
      %v422 = vmax.f32 %v360, 0.0
      %v423 = vmax.f32 %v363, 0.0
      %v424 = vmax.f32 %v368, 0.0
      %v425 = vmax.f32 %v371, 0.0
      %v426 = vmax.f32 %v376, 0.0
      %v427 = vmax.f32 %v379, 0.0
      %v428 = vmax.f32 %v384, 0.0
      %v429 = vmax.f32 %v387, 0.0
      %v430 = vmax.f32 %v392, 0.0
      %v431 = vmax.f32 %v395, 0.0
      %v432 = vmax.f32 %v400, 0.0
      %v433 = vmax.f32 %v403, 0.0
      %v434 = vmax.f32 %v408, 0.0
      %v435 = vmax.f32 %v411, 0.0
      %v436 = vmax.f32 %v416, 0.0
      %v437 = vmax.f32 %v419, 0.0
      %v438 = vpack.c.bf16 %v423, %v422
      %v439 = vpack.c.bf16 %v425, %v424
      %v440 = vpack.c.bf16 %v427, %v426
      %v441 = vpack.c.bf16 %v429, %v428
      %v442 = vpack.c.bf16 %v431, %v430
      %v443 = vpack.c.bf16 %v433, %v432
      %v444 = vpack.c.bf16 %v435, %v434
      %v445 = vpack.c.bf16 %v437, %v436
      %v446 = vld [vmem:[%s3] sm:$0xf]
      %v447 = vld [vmem:[%s3 + $0x4] sm:$0xf]
      %v448 = vld [vmem:[%s3 + $0x8] sm:$0xf]
      %v449 = vld [vmem:[%s3 + $0xc] sm:$0xf]
      %v450 = vld [vmem:[%s3 + $0x10] sm:$0xf]
      %v451 = vld [vmem:[%s3 + $0x14] sm:$0xf]
      %v452 = vld [vmem:[%s3 + $0x18] sm:$0xf]
      %v453 = vld [vmem:[%s3 + $0x1c] sm:$0xf]
      %v454 = vld [vmem:[%s3 + $0x20] sm:$0xf]
      %v455 = vld [vmem:[%s3 + $0x24] sm:$0xf]
      %v456 = vld [vmem:[%s3 + $0x28] sm:$0xf]
      %v457 = vld [vmem:[%s3 + $0x2c] sm:$0xf]
      %v458 = vld [vmem:[%s3 + $0x30] sm:$0xf]
      %v459 = vld [vmem:[%s3 + $0x34] sm:$0xf]
      %v460 = vld [vmem:[%s3 + $0x38] sm:$0xf]
      %v461 = vld [vmem:[%s3 + $0x3c] sm:$0xf]
      %v462 = vld [vmem:[%s4] sm:$0x1]
      %v464 = vlaneseq
      %v465 = vshrl.u32 %v464, 7
      %v466 = vsub.s32 0, %v465
      %v467 = vrot.slane %v462, %v466
      %v485 = vunpack.c.l.b16 %v446
      %v486 = vunpack.c.l.b16 %v447
      %v487 = vunpack.c.l.b16 %v448
      %v488 = vunpack.c.l.b16 %v449
      %v489 = vunpack.c.l.b16 %v450
      %v490 = vunpack.c.l.b16 %v451
      %v491 = vunpack.c.l.b16 %v452
      %v492 = vunpack.c.l.b16 %v453
      %v493 = vunpack.c.l.b16 %v454
      %v494 = vunpack.c.l.b16 %v455
      %v495 = vunpack.c.l.b16 %v456
      %v496 = vunpack.c.l.b16 %v457
      %v497 = vunpack.c.l.b16 %v458
      %v498 = vunpack.c.l.b16 %v459
      %v499 = vunpack.c.l.b16 %v460
      %v500 = vunpack.c.l.b16 %v461
      %v501 = vpack.c.b16 %v486, %v485
      %v502 = vpack.c.b16 %v488, %v487
      %v503 = vpack.c.b16 %v490, %v489
      %v504 = vpack.c.b16 %v492, %v491
      %v505 = vpack.c.b16 %v494, %v493
      %v506 = vpack.c.b16 %v496, %v495
      %v507 = vpack.c.b16 %v498, %v497
      %v508 = vpack.c.b16 %v500, %v499
      %517 = vmatprep.subr.bf16.mxu0 0
      %518 = vmatpush1.bf16.msra.mxu0 %v501
      %519 = vmatprep.subr.bf16.mxu0 0
      %520 = vmatpush1.bf16.msra.mxu0 %v502
      %521 = vmatprep.subr.bf16.mxu0 0
      %522 = vmatpush1.bf16.msra.mxu0 %v503
      %523 = vmatprep.subr.bf16.mxu0 0
      %524 = vmatpush1.bf16.msra.mxu0 %v504
      %525 = vmatprep.subr.bf16.mxu0 0
      %526 = vmatpush1.bf16.msra.mxu0 %v505
      %527 = vmatprep.subr.bf16.mxu0 0
      %528 = vmatpush1.bf16.msra.mxu0 %v506
      %529 = vmatprep.subr.bf16.mxu0 0
      %530 = vmatpush1.bf16.msra.mxu0 %v507
      %531 = vmatprep.subr.bf16.mxu0 0
      %532 = vmatpush1.bf16.msra.mxu0 %v508
      %533 = vmatprep.subr.bf16.mxu0 0
      %534 = vmatpush1.bf16.msra.mxu0 0
      %535 = vmatprep.subr.bf16.mxu0 0
      %536 = vmatpush1.bf16.msra.mxu0 0
      %537 = vmatprep.subr.bf16.mxu0 0
      %538 = vmatpush1.bf16.msra.mxu0 0
      %539 = vmatprep.subr.bf16.mxu0 0
      %540 = vmatpush1.bf16.msra.mxu0 0
      %541 = vmatprep.subr.bf16.mxu0 0
      %542 = vmatpush1.bf16.msra.mxu0 0
      %543 = vmatprep.subr.bf16.mxu0 0
      %544 = vmatpush1.bf16.msra.mxu0 0
      %545 = vmatprep.subr.bf16.mxu0 0
      %546 = vmatpush1.bf16.msra.mxu0 0
      %547 = vmatprep.subr.bf16.mxu0 0
      %548 = vmatpush1.bf16.msra.mxu0 0
      %549 = vmatprep.mubr.bf16.mxu0 0
      %550 = vmatmul.mubr.bf16.gmra.mrb[0].mxu0 %v438
      %v551 = vpop.f32.mrb[0].mxu0
      %v552 = vadd.f32 %v467, %v551
      %v553 = vpop.f32.mrb[0].mxu0
      %v554 = vpop.f32.mrb[0].mxu0
      %v555 = vadd.f32 %v467, %v554
      %v556 = vpop.f32.mrb[0].mxu0
      %557 = vmatprep.mubr.bf16.mxu0 0
      %558 = vmatmul.mubr.bf16.gmra.mrb[0].mxu0 %v439
      %v559 = vpop.f32.mrb[0].mxu0
      %v560 = vadd.f32 %v467, %v559
      %v561 = vpop.f32.mrb[0].mxu0
      %v562 = vpop.f32.mrb[0].mxu0
      %v563 = vadd.f32 %v467, %v562
      %v564 = vpop.f32.mrb[0].mxu0
      %565 = vmatprep.mubr.bf16.mxu0 0
      %566 = vmatmul.mubr.bf16.gmra.mrb[0].mxu0 %v440
      %v567 = vpop.f32.mrb[0].mxu0
      %v568 = vadd.f32 %v467, %v567
      %v569 = vpop.f32.mrb[0].mxu0
      %v570 = vpop.f32.mrb[0].mxu0
      %v571 = vadd.f32 %v467, %v570
      %v572 = vpop.f32.mrb[0].mxu0
      %573 = vmatprep.mubr.bf16.mxu0 0
      %574 = vmatmul.mubr.bf16.gmra.mrb[0].mxu0 %v441
      %v575 = vpop.f32.mrb[0].mxu0
      %v576 = vadd.f32 %v467, %v575
      %v577 = vpop.f32.mrb[0].mxu0
      %v578 = vpop.f32.mrb[0].mxu0
      %v579 = vadd.f32 %v467, %v578
      %v580 = vpop.f32.mrb[0].mxu0
      %581 = vmatprep.mubr.bf16.mxu0 0
      %582 = vmatmul.mubr.bf16.gmra.mrb[0].mxu0 %v442
      %v583 = vpop.f32.mrb[0].mxu0
      %v584 = vadd.f32 %v467, %v583
      %v585 = vpop.f32.mrb[0].mxu0
      %v586 = vpop.f32.mrb[0].mxu0
      %v587 = vadd.f32 %v467, %v586
      %v588 = vpop.f32.mrb[0].mxu0
      %589 = vmatprep.mubr.bf16.mxu0 0
      %590 = vmatmul.mubr.bf16.gmra.mrb[0].mxu0 %v443
      %v591 = vpop.f32.mrb[0].mxu0
      %v592 = vadd.f32 %v467, %v591
      %v593 = vpop.f32.mrb[0].mxu0
      %v594 = vpop.f32.mrb[0].mxu0
      %v595 = vadd.f32 %v467, %v594
      %v596 = vpop.f32.mrb[0].mxu0
      %597 = vmatprep.mubr.bf16.mxu0 0
      %598 = vmatmul.mubr.bf16.gmra.mrb[0].mxu0 %v444
      %v599 = vpop.f32.mrb[0].mxu0
      %v600 = vadd.f32 %v467, %v599
      %v601 = vpop.f32.mrb[0].mxu0
      %v602 = vpop.f32.mrb[0].mxu0
      %v603 = vadd.f32 %v467, %v602
      %v604 = vpop.f32.mrb[0].mxu0
      %605 = vmatprep.mubr.bf16.mxu0 0
      %606 = vmatmul.mubr.bf16.gmra.mrb[0].mxu0 %v445
      %v607 = vpop.f32.mrb[0].mxu0
      %v608 = vadd.f32 %v467, %v607
      %v609 = vpop.f32.mrb[0].mxu0
      %v610 = vpop.f32.mrb[0].mxu0
      %v611 = vadd.f32 %v467, %v610
      %v612 = vpop.f32.mrb[0].mxu0
      %613 = vdwg.mxu0
      %614 = vst [vmem:[%s226] sm:$0xff] %v552
      %615 = vst [vmem:[%s226 + $0x8] sm:$0xff] %v555
      %616 = vst [vmem:[%s226 + $0x10] sm:$0xff] %v560
      %617 = vst [vmem:[%s226 + $0x18] sm:$0xff] %v563
      %618 = vst [vmem:[%s226 + $0x20] sm:$0xff] %v568
      %619 = vst [vmem:[%s226 + $0x28] sm:$0xff] %v571
      %620 = vst [vmem:[%s226 + $0x30] sm:$0xff] %v576
      %621 = vst [vmem:[%s226 + $0x38] sm:$0xff] %v579
      %622 = vst [vmem:[%s226 + $0x40] sm:$0xff] %v584
      %623 = vst [vmem:[%s226 + $0x48] sm:$0xff] %v587
      %624 = vst [vmem:[%s226 + $0x50] sm:$0xff] %v592
      %625 = vst [vmem:[%s226 + $0x58] sm:$0xff] %v595
      %626 = vst [vmem:[%s226 + $0x60] sm:$0xff] %v600
      %627 = vst [vmem:[%s226 + $0x68] sm:$0xff] %v603
      %628 = vst [vmem:[%s226 + $0x70] sm:$0xff] %v608
      %629 = vst [vmem:[%s226 + $0x78] sm:$0xff] %v611
      %s630 = smul.u32 16, %s16
      %p631 = scmp.lt.s32.totalorder %s630, 31
      %s632 = scalar_select %p631, %s630, 31
      %s633 = smul.addr %s632, 8
      %s634 = scalar_lea.vmem %s5, %s633
      // Predicated region
      $region41: #{decision_transformer_forward.1} parent=39 // pred_check
        %p635 = pneg %p144
      $region42: #{decision_transformer_forward.1} parent=39 // pred_check_branch
        %637 = sbr.rel (%p635) target = $region44
      $region43: #{decision_transformer_forward.1} parent=39 // pred_region
        %s638 = smul.u32 16, %s16
      $region44: #{decision_transformer_forward.1} parent=39 // pred_fallthru
        _
    $region40: #{decision_transformer_forward.1} parent=5 // pred_fallthru
      _
    %p639 = scmp.le.s32.totalorder 2, %s11
    // Predicated region
    $region45: #{decision_transformer_forward.1} parent=5 // pred_check
      %p640 = pneg %p639
    $region46: #{decision_transformer_forward.1} parent=5 // pred_check_branch
      %642 = sbr.rel (%p640) target = $region48
    $region47: #{decision_transformer_forward.1} parent=5 // pred_region
      %s643 = ssub.s32 %s11, 2
      // Predicated region
      $region49: #{decision_transformer_forward.1} parent=47 // pred_check
        %p644 = pneg %p150
      $region50: #{decision_transformer_forward.1} parent=47 // pred_check_branch
        %646 = sbr.rel (%p644) target = $region52
      $region51: #{decision_transformer_forward.1} parent=47 // pred_region
        %s647 = smul.u32 16, %s17
        %p648 = scmp.lt.s32.totalorder %s647, 31
        %s649 = scalar_select %p648, %s647, 31
        %s650 = smul.addr %s649, 8
        %s651 = scalar_lea.vmem %s5, %s650
      $region52: #{decision_transformer_forward.1} parent=47 // pred_fallthru
        _
    $region48: #{decision_transformer_forward.1} parent=5 // pred_fallthru
      _
  $region6: #{decision_transformer_forward.1} parent=0 // loop_footer
    %s15 = sadd.s32 1, %s11
  $region7: #{decision_transformer_forward.1} parent=0 // loop_footer_branch
    %10 = sbr.rel target = $region3
  $region8: #{decision_transformer_forward.1} parent=0 // loop_exit
    _

</llo_original>
